<compile_context>
chip_gen: v7x
topology: tpu7x:2x2x1
jax: 0.10.0
libtpu: 0.0.40
codegen_flags: <defaults>
</compile_context>

<pallas_src>
import functools

import jax
import jax.numpy as jnp
from jax import lax
from jax.experimental import pallas as pl
from jax.experimental.pallas import tpu as pltpu


# ---------------------------------------------------------------------------
# Pallas kernel: 3x3 conv (stride 1, pad 1) + bias + PReLU for one row-tile
# ---------------------------------------------------------------------------
def _conv3x3_prelu_kernel(xt_ref, w_ref, b_ref, a_ref, o_ref, patch_ref, *,
                          TH, W, Cin):
    """One (batch, row-tile) grid step.

    xt_ref   : (TH+2, Wp, Cin)  bf16  zero-padded input slab (1 halo row/col each side)
    w_ref    : (9*Cin, Cout)    bf16  folded 3x3 weights, (kh, kw) major
    b_ref    : (1, Cout)        f32   bias
    a_ref    : (1, Cout)        f32   PReLU slope
    o_ref    : (TH, W, Cout)          output rows of this tile
    patch_ref: (W, 9*Cin)       bf16  VMEM im2col scratch for one output row
    """
    bias = b_ref[...]
    alpha = a_ref[...]

    @pl.loop(0, TH)
    def _row(r):
        # im2col: gather the 9 taps of output row r onto the lane (K) axis so a
        # single MXU dot with K = 9*Cin replaces 9 shallow dots + 8 VPU adds.
        for k in range(9):
            kh, kw = k // 3, k % 3
            patch_ref[:, k * Cin:(k + 1) * Cin] = xt_ref[r + kh, kw:kw + W, :]
        acc = jnp.dot(patch_ref[...], w_ref[...],
                      preferred_element_type=jnp.float32)        # (W, Cout) f32
        acc = acc + bias
        acc = jnp.where(acc >= 0.0, acc, alpha * acc)            # PReLU
        o_ref[r] = acc.astype(o_ref.dtype)


def _pick_row_tile(H, Wp, Cin):
    """Rows per grid step: keep the bf16 input slab ~<=2 MiB (double-buffered
    in+out stays far below the v7x 64 MiB VMEM budget) but take >=8 rows so the
    2 duplicated halo rows are amortized."""
    bytes_per_row = Wp * max(Cin, 1) * 2
    th = (2 * 1024 * 1024) // bytes_per_row - 2
    th = max(8, th)
    th = min(th, 256)
    return int(max(1, min(H, th)))


def conv3x3_prelu(x_nhwc, w, b, alpha, *, out_dtype=jnp.bfloat16, row_tile=None):
    """3x3 conv, stride 1, pad 1, bias, per-channel PReLU.

    x_nhwc: (B, H, W, Cin), w: (3, 3, Cin, Cout), b/alpha: (Cout,)
    returns (B, H, W, Cout) in out_dtype.
    """
    B, H, W, Cin = x_nhwc.shape
    Cout = w.shape[-1]
    Wp = W + 2
    TH = int(min(H, row_tile)) if row_tile else _pick_row_tile(H, Wp, Cin)
    NT = (H + TH - 1) // TH
    Hq = NT * TH

    # zero-pad: 1 top row, (Hq-H+1) bottom rows, 1 col each side -> (B, Hq+2, Wp, Cin)
    xpad = jnp.pad(x_nhwc, ((0, 0), (1, Hq - H + 1), (1, 1), (0, 0)))
    xpad = xpad.astype(jnp.bfloat16)
    # duplicate the 2 halo rows per tile so each grid step reads one contiguous slab
    ridx = (jnp.arange(NT, dtype=jnp.int32)[:, None] * TH
            + jnp.arange(TH + 2, dtype=jnp.int32)[None, :])      # (NT, TH+2)
    xtiles = xpad[:, ridx]                                       # (B, NT, TH+2, Wp, Cin)

    wfold = w.reshape(9 * Cin, Cout).astype(jnp.bfloat16)        # (kh,kw) major, matches patch
    b2 = b.reshape(1, Cout).astype(jnp.float32)
    a2 = alpha.reshape(1, Cout).astype(jnp.float32)

    out_isize = jnp.dtype(out_dtype).itemsize
    in_block = (TH + 2) * Wp * Cin * 2
    out_block = TH * W * Cout * out_isize
    scratch_b = W * 9 * Cin * 2
    vmem_need = 2 * (in_block + out_block) + 9 * Cin * Cout * 2 + scratch_b + 8 * Cout * 4
    vmem_limit = int(min(64 * 1024 * 1024, max(16 * 1024 * 1024, 4 * vmem_need)))

    cost = pl.CostEstimate(
        flops=2 * B * Hq * W * 9 * Cin * Cout,
        transcendentals=0,
        bytes_accessed=int(xtiles.size * 2 + wfold.size * 2
                           + B * Hq * W * Cout * out_isize),
    )

    out = pl.pallas_call(
        functools.partial(_conv3x3_prelu_kernel, TH=TH, W=W, Cin=Cin),
        out_shape=jax.ShapeDtypeStruct((B, NT, TH, W, Cout), out_dtype),
        grid=(B, NT),
        in_specs=[
            pl.BlockSpec((pl.Squeezed(), pl.Squeezed(), TH + 2, Wp, Cin),
                         lambda bi, ti: (bi, ti, 0, 0, 0)),
            pl.BlockSpec((9 * Cin, Cout), lambda bi, ti: (0, 0)),
            pl.BlockSpec((1, Cout), lambda bi, ti: (0, 0)),
            pl.BlockSpec((1, Cout), lambda bi, ti: (0, 0)),
        ],
        out_specs=pl.BlockSpec((pl.Squeezed(), pl.Squeezed(), TH, W, Cout),
                               lambda bi, ti: (bi, ti, 0, 0, 0)),
        scratch_shapes=[pltpu.VMEM((W, 9 * Cin), jnp.bfloat16)],
        compiler_params=pltpu.CompilerParams(
            dimension_semantics=("parallel", "parallel"),
            vmem_limit_bytes=vmem_limit),
        cost_estimate=cost,
    )(xtiles, wfold, b2, a2)

    out = out.reshape(B, Hq, W, Cout)
    return out[:, :H] if Hq != H else out


# ---------------------------------------------------------------------------
# Bilinear interpolation (matches F.interpolate mode='bilinear',
# align_corners=False, antialias=False) -- plain-JAX glue
# ---------------------------------------------------------------------------
def _linear_idx_weights(out_size, in_size):
    i = jnp.arange(out_size, dtype=jnp.float32)
    scale = in_size / out_size
    src = jnp.maximum((i + 0.5) * scale - 0.5, 0.0)
    i0 = jnp.minimum(jnp.floor(src).astype(jnp.int32), in_size - 1)
    i1 = jnp.minimum(i0 + 1, in_size - 1)
    w1 = src - i0.astype(jnp.float32)
    w0 = 1.0 - w1
    return i0, i1, w0, w1


def bilinear_resize_nchw(x, out_h, out_w):
    i0, i1, wy0, wy1 = _linear_idx_weights(out_h, x.shape[2])
    j0, j1, wx0, wx1 = _linear_idx_weights(out_w, x.shape[3])
    r0 = x[:, :, i0, :]
    r1 = x[:, :, i1, :]
    rows = r0 * wy0[None, None, :, None] + r1 * wy1[None, None, :, None]
    c0 = rows[:, :, :, j0]
    c1 = rows[:, :, :, j1]
    return c0 * wx0[None, None, None, :] + c1 * wx1[None, None, None, :]


# ---------------------------------------------------------------------------
# IFBlock parameters (deterministic synthetic init) and forward
# ---------------------------------------------------------------------------
def _conv_layer_params(key, cin, cout):
    k1, k2 = jax.random.split(key)
    w = jax.random.normal(k1, (3, 3, cin, cout), jnp.float32) / jnp.sqrt(9.0 * cin)
    b = jax.random.normal(k2, (cout,), jnp.float32) * 0.01
    alpha = jnp.full((cout,), 0.25, jnp.float32)   # nn.PReLU default init
    return dict(w=w, b=b, alpha=alpha)


def ifblock_init(key, in_planes, c=64, layers=4, in_else=17):
    keys = jax.random.split(key, 2 + layers + 1)
    total_in = in_planes + in_else
    return dict(
        conv0=[_conv_layer_params(keys[0], total_in, c),
               _conv_layer_params(keys[1], c, c)],
        convblock=[_conv_layer_params(keys[2 + i], c, c) for i in range(layers)],
        lastconv=_conv_layer_params(keys[2 + layers], c, 5),
    )


def _pad_out_channels(w, b, alpha, mult=128):
    """Pad Cout up to a lane-dense multiple of 128 (zero weights/bias -> padded
    channels are exactly 0 after PReLU); the wrapper slices them away."""
    cout = w.shape[-1]
    cpad = ((cout + mult - 1) // mult) * mult
    if cpad == cout:
        return w, b, alpha, cout
    pc = cpad - cout
    return (jnp.pad(w, ((0, 0), (0, 0), (0, 0), (0, pc))),
            jnp.pad(b, ((0, pc),)),
            jnp.pad(alpha, ((0, pc),)),
            cout)


def ifblock_forward(params, x, flow=None, feature=None, scale=4):
    """x/flow: NCHW full-res f32, feature: NCHW at 1/scale res.
    Returns (flow, mask, flow_s) exactly like the PyTorch IFBlock.forward."""
    if scale != 1:
        x = bilinear_resize_nchw(x, x.shape[2] // scale, x.shape[3] // scale)
    if flow is not None:
        flow_ds = bilinear_resize_nchw(flow, flow.shape[2] // scale,
                                       flow.shape[3] // scale) * (1.0 / scale)
        x = jnp.concatenate([x, flow_ds], axis=1)
    if feature is not None:
        x = jnp.concatenate([x, feature], axis=1)

    # NCHW -> NHWC for the Pallas conv kernels; hidden activations kept in bf16.
    h = jnp.transpose(x, (0, 2, 3, 1))
    for p in params["conv0"]:
        h = conv3x3_prelu(h, p["w"], p["b"], p["alpha"])
    h0 = h
    for p in params["convblock"]:
        h = conv3x3_prelu(h, p["w"], p["b"], p["alpha"])
    h = h + h0                                                  # residual

    # lastconv: Cout=5 padded to lane-dense 128 inside the kernel, sliced here.
    p = params["lastconv"]
    w5, b5, a5, cout = _pad_out_channels(p["w"], p["b"], p["alpha"], mult=128)
    tmp = conv3x3_prelu(h, w5, b5, a5, out_dtype=jnp.float32)[..., :cout]

    tmp_nchw = jnp.transpose(tmp, (0, 3, 1, 2))
    flow_s = tmp_nchw[:, :4]
    tmp_up = bilinear_resize_nchw(tmp_nchw,
                                  tmp_nchw.shape[2] * scale,
                                  tmp_nchw.shape[3] * scale)
    flow_out = tmp_up[:, :4] * scale
    mask = tmp_up[:, 4:5]
    return flow_out, mask, flow_s


# ---------------------------------------------------------------------------
# XLA reference for the conv+PReLU layer (sanity check of the Pallas kernel)
# ---------------------------------------------------------------------------
def _conv_reference(x_nhwc, w, b, alpha):
    y = lax.conv_general_dilated(
        x_nhwc.astype(jnp.float32), w, window_strides=(1, 1), padding="SAME",
        dimension_numbers=("NHWC", "HWIO", "NHWC"))
    y = y + b.reshape(1, 1, 1, -1)
    return jnp.where(y >= 0.0, y, alpha.reshape(1, 1, 1, -1) * y)


# ---------------------------------------------------------------------------
if __name__ == "__main__":
    key = jax.random.PRNGKey(0)
    kx, kf, kfe, kp = jax.random.split(key, 4)

    B, in_planes, H, W = 2, 4, 16, 16
    c, layers, scale, in_else = 32, 4, 4, 6   # x(4)+flow(4)+feature(2) = in_planes+in_else

    # sanity check the tiled Pallas conv against the XLA reference (multi-tile path)
    xt = jax.random.normal(jax.random.PRNGKey(1), (2, 7, 9, 10), jnp.float32)
    pt = _conv_layer_params(jax.random.PRNGKey(2), 10, 32)
    got = conv3x3_prelu(xt, pt["w"], pt["b"], pt["alpha"],
                        out_dtype=jnp.float32, row_tile=2)
    want = _conv_reference(xt, pt["w"], pt["b"], pt["alpha"])
    err = float(jnp.max(jnp.abs(got - want)))
    assert err < 5e-2, f"conv mismatch: {err}"

    x = jax.random.normal(kx, (B, in_planes, H, W), jnp.float32)
    flow_in = jax.random.normal(kf, (B, 4, H, W), jnp.float32)
    feature = jax.random.normal(kfe, (B, in_else - 4, H // scale, W // scale),
                                jnp.float32)

    params = ifblock_init(kp, in_planes, c=c, layers=layers, in_else=in_else)

    fwd = jax.jit(ifblock_forward, static_argnames=("scale",))
    flow_out, mask, flow_s = fwd(params, x, flow=flow_in, feature=feature,
                                 scale=scale)
    jax.block_until_ready((flow_out, mask, flow_s))

    assert flow_out.shape == (B, 4, H, W)
    assert mask.shape == (B, 1, H, W)
    assert flow_s.shape == (B, 4, H // scale, W // scale)
    assert bool(jnp.isfinite(flow_out).all())
    assert bool(jnp.isfinite(mask).all())
    assert bool(jnp.isfinite(flow_s).all())
    print("KERNEL_OK")
</pallas_src>

<mosaic_0001>
module attributes {stable_mosaic.version = 11 : i64} {
  func.func @_conv3x3_prelu_kernel(%arg0: i32, %arg1: i32, %arg2: memref<1x1x4x11x10xbf16, #tpu.memory_space<vmem>>, %arg3: memref<90x32xbf16, #tpu.memory_space<vmem>>, %arg4: memref<1x32xf32, #tpu.memory_space<vmem>>, %arg5: memref<1x32xf32, #tpu.memory_space<vmem>>, %arg6: memref<1x1x2x9x32xf32, #tpu.memory_space<vmem>>, %arg7: memref<9x90xbf16, #tpu.memory_space<vmem>>) attributes {dimension_semantics = [#tpu.dimension_semantics<parallel>, #tpu.dimension_semantics<parallel>], iteration_bounds = array<i64: 2, 4>, scalar_prefetch = 0 : i64, scratch_operands = 1 : i64, tpu.core_type = #tpu.core_type<tc>, window_params = [{transform_indices = @transform_0, window_bounds = array<i64: 1, 1, 4, 11, 10>}, {pipeline_mode = #tpu.pipeline_mode<synchronous>, transform_indices = @transform_1, window_bounds = array<i64: 90, 32>}, {pipeline_mode = #tpu.pipeline_mode<synchronous>, transform_indices = @transform_2, window_bounds = array<i64: 1, 32>}, {pipeline_mode = #tpu.pipeline_mode<synchronous>, transform_indices = @transform_3, window_bounds = array<i64: 1, 32>}, {transform_indices = @transform_4, window_bounds = array<i64: 1, 1, 2, 9, 32>}]} {
    %c0 = arith.constant 0 : index
    %c0_0 = arith.constant 0 : index
    %0 = vector.load %arg4[%c0, %c0_0] : memref<1x32xf32, #tpu.memory_space<vmem>>, vector<1x32xf32>
    %c0_1 = arith.constant 0 : index
    %c0_2 = arith.constant 0 : index
    %1 = vector.load %arg5[%c0_1, %c0_2] : memref<1x32xf32, #tpu.memory_space<vmem>>, vector<1x32xf32>
    %c0_i32 = arith.constant 0 : i32
    %c2_i32 = arith.constant 2 : i32
    %2 = arith.addi %c0_i32, %c2_i32 : i32
    %c1_i32 = arith.constant 1 : i32
    scf.for %arg8 = %c0_i32 to %2 step %c1_i32  : i32 {
      %c1_i32_4 = arith.constant 1 : i32
      %3 = arith.muli %arg8, %c1_i32_4 : i32
      %c0_i32_5 = arith.constant 0 : i32
      %4 = arith.addi %c0_i32_5, %3 : i32
      %c0_i32_6 = arith.constant 0 : i32
      %5 = arith.addi %4, %c0_i32_6 : i32
      %c0_7 = arith.constant 0 : index
      %c0_8 = arith.constant 0 : index
      %6 = arith.index_cast %5 : i32 to index
      %c0_9 = arith.constant 0 : index
      %c0_10 = arith.constant 0 : index
      %7 = vector.load %arg2[%c0_7, %c0_8, %6, %c0_9, %c0_10] : memref<1x1x4x11x10xbf16, #tpu.memory_space<vmem>>, vector<1x1x1x9x10xbf16>
      %8 = vector.shape_cast %7 : vector<1x1x1x9x10xbf16> to vector<9x10xbf16>
      %c0_11 = arith.constant 0 : index
      %c0_12 = arith.constant 0 : index
      %9 = vector.load %arg7[%c0_11, %c0_12] : memref<9x90xbf16, #tpu.memory_space<vmem>>, vector<9x10xbf16>
      tpu.vector_store %arg7[%c0_11, %c0_12], %8 {strides = array<i32>} : memref<9x90xbf16, #tpu.memory_space<vmem>>, vector<9x10xbf16>,
      %c0_i32_13 = arith.constant 0 : i32
      %10 = arith.addi %4, %c0_i32_13 : i32
      %c0_14 = arith.constant 0 : index
      %c0_15 = arith.constant 0 : index
      %11 = arith.index_cast %10 : i32 to index
      %c1 = arith.constant 1 : index
      %c0_16 = arith.constant 0 : index
      %12 = vector.load %arg2[%c0_14, %c0_15, %11, %c1, %c0_16] : memref<1x1x4x11x10xbf16, #tpu.memory_space<vmem>>, vector<1x1x1x9x10xbf16>
      %13 = vector.shape_cast %12 : vector<1x1x1x9x10xbf16> to vector<9x10xbf16>
      %c0_17 = arith.constant 0 : index
      %c10 = arith.constant 10 : index
      %14 = vector.load %arg7[%c0_17, %c10] : memref<9x90xbf16, #tpu.memory_space<vmem>>, vector<9x10xbf16>
      tpu.vector_store %arg7[%c0_17, %c10], %13 {strides = array<i32>} : memref<9x90xbf16, #tpu.memory_space<vmem>>, vector<9x10xbf16>,
      %c0_i32_18 = arith.constant 0 : i32
      %15 = arith.addi %4, %c0_i32_18 : i32
      %c0_19 = arith.constant 0 : index
      %c0_20 = arith.constant 0 : index
      %16 = arith.index_cast %15 : i32 to index
      %c2 = arith.constant 2 : index
      %c0_21 = arith.constant 0 : index
      %17 = vector.load %arg2[%c0_19, %c0_20, %16, %c2, %c0_21] : memref<1x1x4x11x10xbf16, #tpu.memory_space<vmem>>, vector<1x1x1x9x10xbf16>
      %18 = vector.shape_cast %17 : vector<1x1x1x9x10xbf16> to vector<9x10xbf16>
      %c0_22 = arith.constant 0 : index
      %c20 = arith.constant 20 : index
      %19 = vector.load %arg7[%c0_22, %c20] : memref<9x90xbf16, #tpu.memory_space<vmem>>, vector<9x10xbf16>
      tpu.vector_store %arg7[%c0_22, %c20], %18 {strides = array<i32>} : memref<9x90xbf16, #tpu.memory_space<vmem>>, vector<9x10xbf16>,
      %c1_i32_23 = arith.constant 1 : i32
      %20 = arith.addi %4, %c1_i32_23 : i32
      %c0_24 = arith.constant 0 : index
      %c0_25 = arith.constant 0 : index
      %21 = arith.index_cast %20 : i32 to index
      %c0_26 = arith.constant 0 : index
      %c0_27 = arith.constant 0 : index
      %22 = vector.load %arg2[%c0_24, %c0_25, %21, %c0_26, %c0_27] : memref<1x1x4x11x10xbf16, #tpu.memory_space<vmem>>, vector<1x1x1x9x10xbf16>
      %23 = vector.shape_cast %22 : vector<1x1x1x9x10xbf16> to vector<9x10xbf16>
      %c0_28 = arith.constant 0 : index
      %c30 = arith.constant 30 : index
      %24 = vector.load %arg7[%c0_28, %c30] : memref<9x90xbf16, #tpu.memory_space<vmem>>, vector<9x10xbf16>
      tpu.vector_store %arg7[%c0_28, %c30], %23 {strides = array<i32>} : memref<9x90xbf16, #tpu.memory_space<vmem>>, vector<9x10xbf16>,
      %c1_i32_29 = arith.constant 1 : i32
      %25 = arith.addi %4, %c1_i32_29 : i32
      %c0_30 = arith.constant 0 : index
      %c0_31 = arith.constant 0 : index
      %26 = arith.index_cast %25 : i32 to index
      %c1_32 = arith.constant 1 : index
      %c0_33 = arith.constant 0 : index
      %27 = vector.load %arg2[%c0_30, %c0_31, %26, %c1_32, %c0_33] : memref<1x1x4x11x10xbf16, #tpu.memory_space<vmem>>, vector<1x1x1x9x10xbf16>
      %28 = vector.shape_cast %27 : vector<1x1x1x9x10xbf16> to vector<9x10xbf16>
      %c0_34 = arith.constant 0 : index
      %c40 = arith.constant 40 : index
      %29 = vector.load %arg7[%c0_34, %c40] : memref<9x90xbf16, #tpu.memory_space<vmem>>, vector<9x10xbf16>
      tpu.vector_store %arg7[%c0_34, %c40], %28 {strides = array<i32>} : memref<9x90xbf16, #tpu.memory_space<vmem>>, vector<9x10xbf16>,
      %c1_i32_35 = arith.constant 1 : i32
      %30 = arith.addi %4, %c1_i32_35 : i32
      %c0_36 = arith.constant 0 : index
      %c0_37 = arith.constant 0 : index
      %31 = arith.index_cast %30 : i32 to index
      %c2_38 = arith.constant 2 : index
      %c0_39 = arith.constant 0 : index
      %32 = vector.load %arg2[%c0_36, %c0_37, %31, %c2_38, %c0_39] : memref<1x1x4x11x10xbf16, #tpu.memory_space<vmem>>, vector<1x1x1x9x10xbf16>
      %33 = vector.shape_cast %32 : vector<1x1x1x9x10xbf16> to vector<9x10xbf16>
      %c0_40 = arith.constant 0 : index
      %c50 = arith.constant 50 : index
      %34 = vector.load %arg7[%c0_40, %c50] : memref<9x90xbf16, #tpu.memory_space<vmem>>, vector<9x10xbf16>
      tpu.vector_store %arg7[%c0_40, %c50], %33 {strides = array<i32>} : memref<9x90xbf16, #tpu.memory_space<vmem>>, vector<9x10xbf16>,
      %c2_i32_41 = arith.constant 2 : i32
      %35 = arith.addi %4, %c2_i32_41 : i32
      %c0_42 = arith.constant 0 : index
      %c0_43 = arith.constant 0 : index
      %36 = arith.index_cast %35 : i32 to index
      %c0_44 = arith.constant 0 : index
      %c0_45 = arith.constant 0 : index
      %37 = vector.load %arg2[%c0_42, %c0_43, %36, %c0_44, %c0_45] : memref<1x1x4x11x10xbf16, #tpu.memory_space<vmem>>, vector<1x1x1x9x10xbf16>
      %38 = vector.shape_cast %37 : vector<1x1x1x9x10xbf16> to vector<9x10xbf16>
      %c0_46 = arith.constant 0 : index
      %c60 = arith.constant 60 : index
      %39 = vector.load %arg7[%c0_46, %c60] : memref<9x90xbf16, #tpu.memory_space<vmem>>, vector<9x10xbf16>
      tpu.vector_store %arg7[%c0_46, %c60], %38 {strides = array<i32>} : memref<9x90xbf16, #tpu.memory_space<vmem>>, vector<9x10xbf16>,
      %c2_i32_47 = arith.constant 2 : i32
      %40 = arith.addi %4, %c2_i32_47 : i32
      %c0_48 = arith.constant 0 : index
      %c0_49 = arith.constant 0 : index
      %41 = arith.index_cast %40 : i32 to index
      %c1_50 = arith.constant 1 : index
      %c0_51 = arith.constant 0 : index
      %42 = vector.load %arg2[%c0_48, %c0_49, %41, %c1_50, %c0_51] : memref<1x1x4x11x10xbf16, #tpu.memory_space<vmem>>, vector<1x1x1x9x10xbf16>
      %43 = vector.shape_cast %42 : vector<1x1x1x9x10xbf16> to vector<9x10xbf16>
      %c0_52 = arith.constant 0 : index
      %c70 = arith.constant 70 : index
      %44 = vector.load %arg7[%c0_52, %c70] : memref<9x90xbf16, #tpu.memory_space<vmem>>, vector<9x10xbf16>
      tpu.vector_store %arg7[%c0_52, %c70], %43 {strides = array<i32>} : memref<9x90xbf16, #tpu.memory_space<vmem>>, vector<9x10xbf16>,
      %c2_i32_53 = arith.constant 2 : i32
      %45 = arith.addi %4, %c2_i32_53 : i32
      %c0_54 = arith.constant 0 : index
      %c0_55 = arith.constant 0 : index
      %46 = arith.index_cast %45 : i32 to index
      %c2_56 = arith.constant 2 : index
      %c0_57 = arith.constant 0 : index
      %47 = vector.load %arg2[%c0_54, %c0_55, %46, %c2_56, %c0_57] : memref<1x1x4x11x10xbf16, #tpu.memory_space<vmem>>, vector<1x1x1x9x10xbf16>
      %48 = vector.shape_cast %47 : vector<1x1x1x9x10xbf16> to vector<9x10xbf16>
      %c0_58 = arith.constant 0 : index
      %c80 = arith.constant 80 : index
      %49 = vector.load %arg7[%c0_58, %c80] : memref<9x90xbf16, #tpu.memory_space<vmem>>, vector<9x10xbf16>
      tpu.vector_store %arg7[%c0_58, %c80], %48 {strides = array<i32>} : memref<9x90xbf16, #tpu.memory_space<vmem>>, vector<9x10xbf16>,
      %c0_59 = arith.constant 0 : index
      %c0_60 = arith.constant 0 : index
      %50 = vector.load %arg7[%c0_59, %c0_60] : memref<9x90xbf16, #tpu.memory_space<vmem>>, vector<9x90xbf16>
      %c0_61 = arith.constant 0 : index
      %c0_62 = arith.constant 0 : index
      %51 = vector.load %arg3[%c0_61, %c0_62] : memref<90x32xbf16, #tpu.memory_space<vmem>>, vector<90x32xbf16>
      %cst = arith.constant dense<0.000000e+00> : vector<9x32xf32>
      %52 = tpu.matmul %50, %51, %cst {dimension_numbers = #tpu.dot_dimension_numbers<[1], [0], [0], [1], [0, 0, 1, 1], [], []>} : vector<9x90xbf16>, vector<90x32xbf16>, vector<9x32xf32> -> vector<9x32xf32>
      %53 = vector.broadcast %0 : vector<1x32xf32> to vector<9x32xf32>
      %54 = arith.addf %52, %53 : vector<9x32xf32>
      %cst_63 = arith.constant 0.000000e+00 : f32
      %55 = vector.broadcast %cst_63 : f32 to vector<9x32xf32>
      %56 = arith.cmpf oge, %54, %55 : vector<9x32xf32>
      %57 = vector.broadcast %1 : vector<1x32xf32> to vector<9x32xf32>
      %58 = arith.mulf %57, %54 : vector<9x32xf32>
      %59 = arith.select %56, %54, %58 : vector<9x32xi1>, vector<9x32xf32>
      %c0_64 = arith.constant 0 : index
      %c0_65 = arith.constant 0 : index
      %60 = arith.index_cast %4 : i32 to index
      %c0_66 = arith.constant 0 : index
      %c0_67 = arith.constant 0 : index
      %61 = vector.load %arg6[%c0_64, %c0_65, %60, %c0_66, %c0_67] : memref<1x1x2x9x32xf32, #tpu.memory_space<vmem>>, vector<1x1x1x9x32xf32>
      %62 = vector.shape_cast %61 : vector<1x1x1x9x32xf32> to vector<9x32xf32>
      %63 = vector.shape_cast %59 : vector<9x32xf32> to vector<1x1x1x9x32xf32>
      tpu.vector_store %arg6[%c0_64, %c0_65, %60, %c0_66, %c0_67], %63 {strides = array<i32>} : memref<1x1x2x9x32xf32, #tpu.memory_space<vmem>>, vector<1x1x1x9x32xf32>,
    }
    %c2_i32_3 = arith.constant 2 : i32
    return
  }
  func.func @transform_0(%arg0: i32, %arg1: i32) -> (i32, i32, i32, i32, i32) {
    %c0_i32 = arith.constant 0 : i32
    %c0_i32_0 = arith.constant 0 : i32
    %c0_i32_1 = arith.constant 0 : i32
    %c0_i32_2 = arith.constant 0 : i32
    return %arg0, %arg1, %c0_i32, %c0_i32_0, %c0_i32_1 : i32, i32, i32, i32, i32
  }
  func.func @transform_1(%arg0: i32, %arg1: i32) -> (i32, i32) {
    %c0_i32 = arith.constant 0 : i32
    %c0_i32_0 = arith.constant 0 : i32
    %c0_i32_1 = arith.constant 0 : i32
    return %c0_i32, %c0_i32_0 : i32, i32
  }
  func.func @transform_2(%arg0: i32, %arg1: i32) -> (i32, i32) {
    %c0_i32 = arith.constant 0 : i32
    %c0_i32_0 = arith.constant 0 : i32
    %c0_i32_1 = arith.constant 0 : i32
    return %c0_i32, %c0_i32_0 : i32, i32
  }
  func.func @transform_3(%arg0: i32, %arg1: i32) -> (i32, i32) {
    %c0_i32 = arith.constant 0 : i32
    %c0_i32_0 = arith.constant 0 : i32
    %c0_i32_1 = arith.constant 0 : i32
    return %c0_i32, %c0_i32_0 : i32, i32
  }
  func.func @transform_4(%arg0: i32, %arg1: i32) -> (i32, i32, i32, i32, i32) {
    %c0_i32 = arith.constant 0 : i32
    %c0_i32_0 = arith.constant 0 : i32
    %c0_i32_1 = arith.constant 0 : i32
    %c0_i32_2 = arith.constant 0 : i32
    return %arg0, %arg1, %c0_i32, %c0_i32_0, %c0_i32_1 : i32, i32, i32, i32, i32
  }
}

</mosaic_0001>

<llo_original>
// kernel: tpu_custom_call.1
$region0: #{tpu_custom_call.1}
  #allocation0 [shape = 'u32[]', space=smem, size = 0x4, offset = 0x4, fixed_abs, tag = 'smem constant byte address 0x4 - core index']
  #allocation1 [shape = 'u32[144,128]{1,0:T(1,128)}', space=vmem, size = 0x12000, scoped, tag = 'internal scratch']
  #allocation2 [shape = 'bf16[9,90]{1,0:T(8,128)(2,1)}', space=vmem, size = 0x1000, scoped, tag = 'scratch operand']
  %s0 = inlined_call_operand.vmem [shape: bf16[2,4,4,11,10], index: 0, kind: input, shape index: {}]
  %s1 = inlined_call_operand.vmem [shape: bf16[90,32], index: 1, kind: input, shape index: {}]
  %s2 = inlined_call_operand.vmem [shape: f32[1,32], index: 2, kind: input, shape index: {}]
  %s3 = inlined_call_operand.vmem [shape: f32[1,32], index: 3, kind: input, shape index: {}]
  %s4 = inlined_call_operand.vmem [shape: f32[2,4,2,9,32], index: 4, kind: output, shape index: {}]
  %s5 = sld [smem:[#allocation0]]
  $region56: #{tpu_custom_call.1} parent=0
    _
  %s7 = ssub.s32 1, %s5
  %s8 = scalar_select 0, %s7, %s5
  loop: start=0, step=1, limit=10
  $region2: #{tpu_custom_call.1} parent=0 // loop_pre_header
    _
  $region3: #{tpu_custom_call.1} parent=0 // loop_header
    %s10 = sphi 0, %s14
    %p11 = scmp.ge.s32.totalorder %s10, 10
    %s17 = sphi 0, %s29
    %s18 = sphi 0, %s25
    %s19 = sphi 0, %s17
    %s20 = sphi 0, %s18
    %s21 = sphi 0, %s19
    %s22 = sphi 0, %s20
    %s34 = sphi 0, %s36
    %s37 = sphi 0, %s34
    %s38 = sphi 0, %s37
    %s54 = sphi 0, %s38
    %s58 = sphi 0, %s58
    %s60 = sphi 0, %s58
    %s61 = sphi 0, %s60
    %s75 = sphi 0, %s61
    %s79 = sphi 0, %s79
    %s81 = sphi 0, %s79
    %s82 = sphi 0, %s81
    %s96 = sphi 0, %s82
    %s100 = sphi 0, %s100
    %s102 = sphi 0, %s100
    %s103 = sphi 0, %s102
    %s117 = sphi 0, %s103
    %s125 = sphi 0, %s127
    %s128 = sphi 0, %s125
    %s129 = sphi 0, %s128
    %s145 = sphi 0, %s129
  $region4: #{tpu_custom_call.1} parent=0 // loop_header_branch
    %13 = sbr.rel (%p11) target = $region8
  $region5: #{tpu_custom_call.1} parent=0 // loop_body
    %s15 = ssub.s32 %s10, 1
    %s16 = ssub.s32 %s10, 2
    %s23 = sadd.s32 1, %s18
    %p24 = scmp.ge.s32.totalorder %s23, 4
    %s25 = scalar_select %p24, 0, %s23
    %s26 = sadd.s32 1, %s17
    %s27 = scalar_select %p24, %s26, %s17
    %p28 = scmp.ge.s32.totalorder %s27, 2
    %s29 = scalar_select %p28, 0, %s27
    %s30 = ssub.s32 %s17, %s29
    %s31 = ssub.s32 %s18, %s25
    %s32 = sor.u32 %s30, %s31
    %p33 = scmp.eq.s32.totalorder %s32, 0
    %s35 = sadd.s32 %s34, 1
    %s36 = scalar_select %p33, %s34, %s35
    %p39 = pneg %p33
    %p40 = scmp.eq.s32.totalorder %s10, 7
    %p41 = por %p39, %p40
    %p42 = scmp.ne.s32.totalorder %s34, %s37
    %p43 = scmp.eq.s32.totalorder %s10, 0
    %p44 = por %p42, %p43
    %p45 = scmp.ne.s32.totalorder %s34, %s37
    %p46 = scmp.eq.s32.totalorder %s15, 7
    %p47 = por %p45, %p46
    %p48 = scmp.ne.s32.totalorder %s37, %s38
    %p49 = scmp.eq.s32.totalorder %s15, 0
    %p50 = por %p48, %p49
    %p51 = scmp.ne.s32.totalorder %s37, %s38
    %p52 = scmp.eq.s32.totalorder %s16, 7
    %p53 = por %p51, %p52
    %p55 = scmp.ne.s32.totalorder %s38, %s54
    %p56 = scmp.eq.s32.totalorder %s16, 0
    %p57 = por %p55, %p56
    %s59 = sadd.s32 %s58, 1
    %p62 = scmp.eq.s32.totalorder %s10, 7
    %p63 = scmp.ne.s32.totalorder %s58, %s60
    %p64 = scmp.eq.s32.totalorder %s10, 0
    %p65 = por %p63, %p64
    %p66 = scmp.ne.s32.totalorder %s58, %s60
    %p67 = scmp.eq.s32.totalorder %s15, 7
    %p68 = por %p66, %p67
    %p69 = scmp.ne.s32.totalorder %s60, %s61
    %p70 = scmp.eq.s32.totalorder %s15, 0
    %p71 = por %p69, %p70
    %p72 = scmp.ne.s32.totalorder %s60, %s61
    %p73 = scmp.eq.s32.totalorder %s16, 7
    %p74 = por %p72, %p73
    %p76 = scmp.ne.s32.totalorder %s61, %s75
    %p77 = scmp.eq.s32.totalorder %s16, 0
    %p78 = por %p76, %p77
    %s80 = sadd.s32 %s79, 1
    %p83 = scmp.eq.s32.totalorder %s10, 7
    %p84 = scmp.ne.s32.totalorder %s79, %s81
    %p85 = scmp.eq.s32.totalorder %s10, 0
    %p86 = por %p84, %p85
    %p87 = scmp.ne.s32.totalorder %s79, %s81
    %p88 = scmp.eq.s32.totalorder %s15, 7
    %p89 = por %p87, %p88
    %p90 = scmp.ne.s32.totalorder %s81, %s82
    %p91 = scmp.eq.s32.totalorder %s15, 0
    %p92 = por %p90, %p91
    %p93 = scmp.ne.s32.totalorder %s81, %s82
    %p94 = scmp.eq.s32.totalorder %s16, 7
    %p95 = por %p93, %p94
    %p97 = scmp.ne.s32.totalorder %s82, %s96
    %p98 = scmp.eq.s32.totalorder %s16, 0
    %p99 = por %p97, %p98
    %s101 = sadd.s32 %s100, 1
    %p104 = scmp.eq.s32.totalorder %s10, 7
    %p105 = scmp.ne.s32.totalorder %s100, %s102
    %p106 = scmp.eq.s32.totalorder %s10, 0
    %p107 = por %p105, %p106
    %p108 = scmp.ne.s32.totalorder %s100, %s102
    %p109 = scmp.eq.s32.totalorder %s15, 7
    %p110 = por %p108, %p109
    %p111 = scmp.ne.s32.totalorder %s102, %s103
    %p112 = scmp.eq.s32.totalorder %s15, 0
    %p113 = por %p111, %p112
    %p114 = scmp.ne.s32.totalorder %s102, %s103
    %p115 = scmp.eq.s32.totalorder %s16, 7
    %p116 = por %p114, %p115
    %p118 = scmp.ne.s32.totalorder %s103, %s117
    %p119 = scmp.eq.s32.totalorder %s16, 0
    %p120 = por %p118, %p119
    %s121 = ssub.s32 %s17, %s29
    %s122 = ssub.s32 %s18, %s25
    %s123 = sor.u32 %s121, %s122
    %p124 = scmp.eq.s32.totalorder %s123, 0
    %s126 = sadd.s32 %s125, 1
    %s127 = scalar_select %p124, %s125, %s126
    %p130 = pneg %p124
    %p131 = scmp.eq.s32.totalorder %s10, 7
    %p132 = por %p130, %p131
    %p133 = scmp.ne.s32.totalorder %s125, %s128
    %p134 = scmp.eq.s32.totalorder %s10, 0
    %p135 = por %p133, %p134
    %p136 = scmp.ne.s32.totalorder %s125, %s128
    %p137 = scmp.eq.s32.totalorder %s15, 7
    %p138 = por %p136, %p137
    %p139 = scmp.ne.s32.totalorder %s128, %s129
    %p140 = scmp.eq.s32.totalorder %s15, 0
    %p141 = por %p139, %p140
    %p142 = scmp.ne.s32.totalorder %s128, %s129
    %p143 = scmp.eq.s32.totalorder %s16, 7
    %p144 = por %p142, %p143
    %p146 = scmp.ne.s32.totalorder %s129, %s145
    %p147 = scmp.eq.s32.totalorder %s16, 0
    %p148 = por %p146, %p147
    %p149 = scmp.le.s32.totalorder 1, %s10
    %p150 = scmp.lt.s32.totalorder %s10, 9
    %p151 = pnand %p149, %p150
    %p152 = pneg %p151
    // Predicated region
    $region9: #{tpu_custom_call.1} parent=5 // pred_check
      _
    $region10: #{tpu_custom_call.1} parent=5 // pred_check_branch
      %154 = sbr.rel (%p151) target = $region12
    $region11: #{tpu_custom_call.1} parent=5 // pred_region
      %s155 = ssub.s32 %s10, 1
      // Predicated region
      $region13: #{tpu_custom_call.1} parent=11 // pred_check
        %p156 = pneg %p71
      $region14: #{tpu_custom_call.1} parent=11 // pred_check_branch
        %158 = sbr.rel (%p156) target = $region16
      $region15: #{tpu_custom_call.1} parent=11 // pred_region
        _
      $region16: #{tpu_custom_call.1} parent=11 // pred_fallthru
        _
      // Predicated region
      $region17: #{tpu_custom_call.1} parent=11 // pred_check
        %p159 = pneg %p92
      $region18: #{tpu_custom_call.1} parent=11 // pred_check_branch
        %161 = sbr.rel (%p159) target = $region20
      $region19: #{tpu_custom_call.1} parent=11 // pred_region
        _
      $region20: #{tpu_custom_call.1} parent=11 // pred_fallthru
        _
      // Predicated region
      $region21: #{tpu_custom_call.1} parent=11 // pred_check
        %p162 = pneg %p113
      $region22: #{tpu_custom_call.1} parent=11 // pred_check_branch
        %164 = sbr.rel (%p162) target = $region24
      $region23: #{tpu_custom_call.1} parent=11 // pred_region
        _
      $region24: #{tpu_custom_call.1} parent=11 // pred_fallthru
        _
    $region12: #{tpu_custom_call.1} parent=5 // pred_fallthru
      _
    %p165 = scmp.lt.s32.totalorder %s10, 8
    // Predicated region
    $region25: #{tpu_custom_call.1} parent=5 // pred_check
      %p166 = pneg %p165
    $region26: #{tpu_custom_call.1} parent=5 // pred_check_branch
      %168 = sbr.rel (%p166) target = $region28
    $region27: #{tpu_custom_call.1} parent=5 // pred_region
      // Predicated region
      $region29: #{tpu_custom_call.1} parent=27 // pred_check
        %p169 = pneg %p44
      $region30: #{tpu_custom_call.1} parent=27 // pred_check_branch
        %171 = sbr.rel (%p169) target = $region32
      $region31: #{tpu_custom_call.1} parent=27 // pred_region
        %p172 = scmp.lt.s32.totalorder %s17, 1
        %s173 = scalar_select %p172, %s17, 1
        %p174 = scmp.lt.s32.totalorder %s18, 3
        %s175 = scalar_select %p174, %s18, 3
        %s176 = smul.addr %s175, 8
        %s177 = smul.addr %s173, 32
        %s178 = sadd.s32 %s176, %s177
        %s179 = smul.addr %s178, 4
        %s180 = scalar_lea.vmem %s0, %s179
      $region32: #{tpu_custom_call.1} parent=27 // pred_fallthru
        _
    $region28: #{tpu_custom_call.1} parent=5 // pred_fallthru
      _
    %p181 = scmp.le.s32.totalorder 1, %s10
    %p182 = scmp.lt.s32.totalorder %s10, 9
    %p183 = pnand %p181, %p182
    %p184 = pneg %p183
    // Predicated region
    $region33: #{tpu_custom_call.1} parent=5 // pred_check
      _
    $region34: #{tpu_custom_call.1} parent=5 // pred_check_branch
      %186 = sbr.rel (%p183) target = $region36
    $region35: #{tpu_custom_call.1} parent=5 // pred_region
      %s187 = ssub.s32 %s10, 1
      %p188 = scmp.lt.s32.totalorder %s19, 1
      %s189 = scalar_select %p188, %s19, 1
      %p190 = scmp.lt.s32.totalorder %s20, 3
      %s191 = scalar_select %p190, %s20, 3
      %s192 = smul.addr %s191, 8
      %s193 = smul.addr %s189, 32
      %s194 = sadd.s32 %s192, %s193
      %s195 = smul.addr %s194, 4
      %s196 = scalar_lea.vmem %s0, %s195
      %p197 = pneg %p50
      %p198 = pneg %p47
      %p199 = pneg %p71
      %p200 = pneg %p68
      %p201 = pneg %p92
      %p202 = pneg %p89
      %p203 = pneg %p113
      %p204 = pneg %p110
      %p205 = pneg %p141
      %p206 = pneg %p138
      %p207 = scmp.lt.s32.totalorder %s19, 1
      %s208 = scalar_select %p207, %s19, 1
      %p209 = scmp.lt.s32.totalorder %s20, 3
      %s210 = scalar_select %p209, %s20, 3
      %s211 = smul.addr %s210, 4
      %s212 = smul.addr %s208, 16
      %s213 = sadd.s32 %s211, %s212
      %s214 = smul.addr %s213, 8
      %s215 = scalar_lea.vmem %s4, %s214
      %p216 = scmp.lt.s32.totalorder %s19, 1
      %s217 = scalar_select %p216, %s19, 1
      %p218 = scmp.lt.s32.totalorder %s20, 3
      %s219 = scalar_select %p218, %s20, 3
      %s220 = smul.addr %s219, 8
      %s221 = smul.addr %s217, 32
      %s222 = sadd.s32 %s220, %s221
      %s223 = smul.addr %s222, 4
      %s224 = scalar_lea.vmem %s0, %s223
      %p225 = scmp.lt.s32.totalorder %s19, 1
      %s226 = scalar_select %p225, %s19, 1
      %p227 = scmp.lt.s32.totalorder %s20, 3
      %s228 = scalar_select %p227, %s20, 3
      %s229 = smul.addr %s228, 4
      %s230 = smul.addr %s226, 16
      %s231 = sadd.s32 %s229, %s230
      %s232 = smul.addr %s231, 8
      %s233 = scalar_lea.vmem %s4, %s232
      %v235 = vld [vmem:[%s2] sm:$0x1]
      %v236 = vld [vmem:[%s3] sm:$0x1]
      loop: start=0, step=1, limit=2
      $region37: #{tpu_custom_call.1} parent=35 // loop_pre_header
        _
      $region38: #{tpu_custom_call.1} parent=35 // loop_header
        %s238 = sphi 0, %s242
        %p239 = scmp.ge.s32.totalorder %s238, 2
      $region39: #{tpu_custom_call.1} parent=35 // loop_header_branch
        %241 = sbr.rel (%p239) target = $region43
      $region40: #{tpu_custom_call.1} parent=35 // loop_body
        %s243 = smul.u32 %s238, 2
        %s244 = smul.addr %s243, 4
        %s245 = scalar_lea.vmem %s224, %s244
        %v246 = vld [vmem:[%s245] sm:$0xf]
        %v247 = vld [vmem:[%s245 + $0x4] sm:$0x1]
        %vm248 = vcmask 76800
        %249 = vst.msk [vmem:[#allocation2] sm:$0xf] %vm248, %v246
        %vm250 = vcmask 73728
        %vm251 = vsmask.f32 256
        %vm252 = vmand %vm250, %vm251
        %v253 = vld [vmem:[#allocation2 + $0x4] sm:$0x1]
        %v254 = vsel %vm252, %v247, %v253
        %255 = vst [vmem:[#allocation2 + $0x4] sm:$0x1] %v254
        %v256 = vld [vmem:[%s245] sm:$0xf]
        %v257 = vld [vmem:[%s245 + $0x4] sm:$0x1]
        %vm258 = vsmask.f32 3328
        %vm259 = vsmask.f32 7440
        %vm260 = vmor %vm258, %vm259
        %v262 = vshrl.u32 %v256, 16
        %v264 = vrot.slane %v262, 4
        %v265 = vshll.u32 %v256, 16
        %v267 = vrot.slane %v265, 5
        %v268 = vor.u32 %v264, %v267
        %v269 = vrot.slane %v268, 4
        %v271 = vshll.u32 %v257, 16
        %v273 = vrot.slane %v271, 5
        %v274 = vsel %vm260, %v269, %v273
        %v275 = vshrl.u32 %v257, 16
        %v277 = vrot.slane %v275, 4
        %v278 = vrot.slane %v277, 4
        %279 = vrot.lane.b32.xlu0 %v274, 10
        %v280 = vpop.permute.xlu0 %279
        %281 = vrot.lane.b32.xlu0 %v278, 10
        %v282 = vpop.permute.xlu0 %281
        %vm285 = vcmask 158800
        %286 = vst.msk [vmem:[#allocation2] sm:$0xf] %vm285, %v280
        %vm287 = vcmask 155728
        %vm288 = vmand %vm287, %vm251
        %v289 = vld [vmem:[#allocation2 + $0x4] sm:$0x1]
        %v290 = vsel %vm288, %v282, %v289
        %291 = vst [vmem:[#allocation2 + $0x4] sm:$0x1] %v290
        %v292 = vld [vmem:[%s245] sm:$0xe]
        %v293 = vld [vmem:[%s245 + $0x4] sm:$0x3]
        %vm296 = vcmask 1042432
        %vm297 = vcmask 1046532
        %vm298 = vmor %vm296, %vm297
        %v299 = vrot.slane %v292, 5
        %v300 = vrot.slane %v299, 4
        %v301 = vrot.slane %v293, 5
        %v302 = vsel %vm298, %v300, %v301
        %v303 = vrot.slane %v301, 4
        %304 = vrot.lane.b32.xlu0 %v302, 20
        %v305 = vpop.permute.xlu0 %304
        %306 = vrot.lane.b32.xlu0 %v303, 20
        %v307 = vpop.permute.xlu0 %306
        %vm310 = vcmask 240800
        %311 = vst.msk [vmem:[#allocation2] sm:$0xf] %vm310, %v305
        %vm312 = vcmask 237728
        %vm313 = vmand %vm312, %vm251
        %v314 = vld [vmem:[#allocation2 + $0x4] sm:$0x1]
        %v315 = vsel %vm313, %v307, %v314
        %316 = vst [vmem:[#allocation2 + $0x4] sm:$0x1] %v315
        %s317 = sadd.s32 %s238, 1
        %s318 = smul.u32 %s317, 2
        %s319 = smul.addr %s318, 4
        %s320 = scalar_lea.vmem %s224, %s319
        %v321 = vld [vmem:[%s320] sm:$0xf]
        %v322 = vld [vmem:[%s320 + $0x4] sm:$0x1]
        %325 = vrot.lane.b32.xlu0 %v321, 30
        %v326 = vpop.permute.xlu0 %325
        %327 = vrot.lane.b32.xlu0 %v322, 30
        %v328 = vpop.permute.xlu0 %327
        %vm331 = vcmask 322800
        %332 = vst.msk [vmem:[#allocation2] sm:$0xf] %vm331, %v326
        %vm333 = vcmask 319728
        %vm334 = vmand %vm333, %vm251
        %v335 = vld [vmem:[#allocation2 + $0x4] sm:$0x1]
        %v336 = vsel %vm334, %v328, %v335
        %337 = vst [vmem:[#allocation2 + $0x4] sm:$0x1] %v336
        %v338 = vld [vmem:[%s320] sm:$0xf]
        %v339 = vld [vmem:[%s320 + $0x4] sm:$0x1]
        %v341 = vshrl.u32 %v338, 16
        %v343 = vrot.slane %v341, 4
        %v344 = vshll.u32 %v338, 16
        %v346 = vrot.slane %v344, 5
        %v347 = vor.u32 %v343, %v346
        %v348 = vrot.slane %v347, 4
        %v350 = vshll.u32 %v339, 16
        %v352 = vrot.slane %v350, 5
        %v353 = vsel %vm260, %v348, %v352
        %v354 = vshrl.u32 %v339, 16
        %v356 = vrot.slane %v354, 4
        %v357 = vrot.slane %v356, 4
        %358 = vrot.lane.b32.xlu0 %v353, 40
        %v359 = vpop.permute.xlu0 %358
        %360 = vrot.lane.b32.xlu0 %v357, 40
        %v361 = vpop.permute.xlu0 %360
        %vm364 = vcmask 404800
        %365 = vst.msk [vmem:[#allocation2] sm:$0xf] %vm364, %v359
        %vm366 = vcmask 401728
        %vm367 = vmand %vm366, %vm251
        %v368 = vld [vmem:[#allocation2 + $0x4] sm:$0x1]
        %v369 = vsel %vm367, %v361, %v368
        %370 = vst [vmem:[#allocation2 + $0x4] sm:$0x1] %v369
        %v371 = vld [vmem:[%s320] sm:$0xe]
        %v372 = vld [vmem:[%s320 + $0x4] sm:$0x3]
        %v375 = vrot.slane %v371, 5
        %v376 = vrot.slane %v375, 4
        %v377 = vrot.slane %v372, 5
        %v378 = vsel %vm298, %v376, %v377
        %v379 = vrot.slane %v377, 4
        %380 = vrot.lane.b32.xlu0 %v378, 50
        %v381 = vpop.permute.xlu0 %380
        %382 = vrot.lane.b32.xlu0 %v379, 50
        %v383 = vpop.permute.xlu0 %382
        %vm386 = vcmask 486800
        %387 = vst.msk [vmem:[#allocation2] sm:$0xf] %vm386, %v381
        %vm388 = vcmask 483728
        %vm389 = vmand %vm388, %vm251
        %v390 = vld [vmem:[#allocation2 + $0x4] sm:$0x1]
        %v391 = vsel %vm389, %v383, %v390
        %392 = vst [vmem:[#allocation2 + $0x4] sm:$0x1] %v391
        %s393 = sadd.s32 %s238, 2
        %s394 = smul.u32 %s393, 2
        %s395 = smul.addr %s394, 4
        %s396 = scalar_lea.vmem %s224, %s395
        %v397 = vld [vmem:[%s396] sm:$0xf]
        %v398 = vld [vmem:[%s396 + $0x4] sm:$0x1]
        %401 = vrot.lane.b32.xlu0 %v397, 60
        %v402 = vpop.permute.xlu0 %401
        %403 = vrot.lane.b32.xlu0 %v398, 60
        %v404 = vpop.permute.xlu0 %403
        %vm407 = vcmask 568800
        %408 = vst.msk [vmem:[#allocation2] sm:$0xf] %vm407, %v402
        %vm409 = vcmask 565728
        %vm410 = vmand %vm409, %vm251
        %v411 = vld [vmem:[#allocation2 + $0x4] sm:$0x1]
        %v412 = vsel %vm410, %v404, %v411
        %413 = vst [vmem:[#allocation2 + $0x4] sm:$0x1] %v412
        %v414 = vld [vmem:[%s396] sm:$0xf]
        %v415 = vld [vmem:[%s396 + $0x4] sm:$0x1]
        %v417 = vshrl.u32 %v414, 16
        %v419 = vrot.slane %v417, 4
        %v420 = vshll.u32 %v414, 16
        %v422 = vrot.slane %v420, 5
        %v423 = vor.u32 %v419, %v422
        %v424 = vrot.slane %v423, 4
        %v426 = vshll.u32 %v415, 16
        %v428 = vrot.slane %v426, 5
        %v429 = vsel %vm260, %v424, %v428
        %v430 = vshrl.u32 %v415, 16
        %v432 = vrot.slane %v430, 4
        %v433 = vrot.slane %v432, 4
        %434 = vrot.lane.b32.xlu0 %v429, 70
        %v435 = vpop.permute.xlu0 %434
        %436 = vrot.lane.b32.xlu0 %v433, 70
        %v437 = vpop.permute.xlu0 %436
        %vm440 = vcmask 650800
        %441 = vst.msk [vmem:[#allocation2] sm:$0xf] %vm440, %v435
        %vm442 = vcmask 647728
        %vm443 = vmand %vm442, %vm251
        %v444 = vld [vmem:[#allocation2 + $0x4] sm:$0x1]
        %v445 = vsel %vm443, %v437, %v444
        %446 = vst [vmem:[#allocation2 + $0x4] sm:$0x1] %v445
        %v447 = vld [vmem:[%s396] sm:$0xe]
        %v448 = vld [vmem:[%s396 + $0x4] sm:$0x3]
        %v451 = vrot.slane %v447, 5
        %v452 = vrot.slane %v451, 4
        %v453 = vrot.slane %v448, 5
        %v454 = vsel %vm298, %v452, %v453
        %v455 = vrot.slane %v453, 4
        %456 = vrot.lane.b32.xlu0 %v454, 80
        %v457 = vpop.permute.xlu0 %456
        %458 = vrot.lane.b32.xlu0 %v455, 80
        %v459 = vpop.permute.xlu0 %458
        %vm462 = vcmask 732800
        %463 = vst.msk [vmem:[#allocation2] sm:$0xf] %vm462, %v457
        %vm464 = vcmask 729728
        %vm465 = vmand %vm464, %vm251
        %v466 = vld [vmem:[#allocation2 + $0x4] sm:$0x1]
        %v467 = vsel %vm465, %v459, %v466
        %468 = vst [vmem:[#allocation2 + $0x4] sm:$0x1] %v467
        %v469 = vld [vmem:[#allocation2] sm:$0xf]
        %v470 = vld [vmem:[#allocation2 + $0x4] sm:$0x1]
        %v471 = vld [vmem:[%s1] sm:$0xf]
        %v472 = vld [vmem:[%s1 + $0x4] sm:$0xf]
        %v473 = vld [vmem:[%s1 + $0x8] sm:$0xf]
        %v474 = vld [vmem:[%s1 + $0xc] sm:$0xf]
        %v475 = vld [vmem:[%s1 + $0x10] sm:$0xf]
        %v476 = vld [vmem:[%s1 + $0x14] sm:$0xf]
        %v477 = vld [vmem:[%s1 + $0x18] sm:$0xf]
        %v478 = vld [vmem:[%s1 + $0x1c] sm:$0xf]
        %v479 = vld [vmem:[%s1 + $0x20] sm:$0xf]
        %v480 = vld [vmem:[%s1 + $0x24] sm:$0xf]
        %v481 = vld [vmem:[%s1 + $0x28] sm:$0xf]
        %v482 = vld [vmem:[%s1 + $0x2c] sm:$0x1]
        %v484 = vlaneseq
        %v485 = vshrl.u32 %v484, 7
        %v486 = vsub.s32 0, %v485
        %v487 = vrot.slane %v235, %v486
        %v491 = vunpack.c.l.b16 %v469
        %v492 = vunpack.c.l.b16 %v470
        %v493 = vpack.c.b16 %v492, %v491
        %v506 = vunpack.c.l.b16 %v471
        %v507 = vunpack.c.l.b16 %v472
        %v508 = vunpack.c.l.b16 %v473
        %v509 = vunpack.c.l.b16 %v474
        %v510 = vunpack.c.l.b16 %v475
        %v511 = vunpack.c.l.b16 %v476
        %v512 = vunpack.c.l.b16 %v477
        %v513 = vunpack.c.l.b16 %v478
        %v514 = vunpack.c.l.b16 %v479
        %v515 = vunpack.c.l.b16 %v480
        %v516 = vunpack.c.l.b16 %v481
        %v517 = vunpack.c.l.b16 %v482
        %v518 = vpack.c.b16 %v507, %v506
        %v519 = vpack.c.b16 %v509, %v508
        %v520 = vpack.c.b16 %v511, %v510
        %v521 = vpack.c.b16 %v513, %v512
        %v522 = vpack.c.b16 %v515, %v514
        %v523 = vpack.c.b16 %v517, %v516
        %vm529 = vcmask 736256
        %v531 = vsel %vm529, %v493, 0
        %vm533 = vcmask 1044480
        %v535 = vsel %vm533, %v523, 0
        %537 = vmatprep.subr.bf16.mxu0 0
        %538 = vmatpush1.bf16.msra.mxu0 %v518
        %539 = vmatprep.subr.bf16.mxu0 0
        %540 = vmatpush1.bf16.msra.mxu0 %v519
        %541 = vmatprep.subr.bf16.mxu0 0
        %542 = vmatpush1.bf16.msra.mxu0 %v520
        %543 = vmatprep.subr.bf16.mxu0 0
        %544 = vmatpush1.bf16.msra.mxu0 %v521
        %545 = vmatprep.subr.bf16.mxu0 0
        %546 = vmatpush1.bf16.msra.mxu0 %v522
        %547 = vmatprep.subr.bf16.mxu0 0
        %548 = vmatpush1.bf16.msra.mxu0 %v535
        %549 = vmatprep.subr.bf16.mxu0 0
        %550 = vmatpush1.bf16.msra.mxu0 0
        %551 = vmatprep.subr.bf16.mxu0 0
        %552 = vmatpush1.bf16.msra.mxu0 0
        %553 = vmatprep.subr.bf16.mxu0 0
        %554 = vmatpush1.bf16.msra.mxu0 0
        %555 = vmatprep.subr.bf16.mxu0 0
        %556 = vmatpush1.bf16.msra.mxu0 0
        %557 = vmatprep.subr.bf16.mxu0 0
        %558 = vmatpush1.bf16.msra.mxu0 0
        %559 = vmatprep.subr.bf16.mxu0 0
        %560 = vmatpush1.bf16.msra.mxu0 0
        %561 = vmatprep.subr.bf16.mxu0 0
        %562 = vmatpush1.bf16.msra.mxu0 0
        %563 = vmatprep.subr.bf16.mxu0 0
        %564 = vmatpush1.bf16.msra.mxu0 0
        %565 = vmatprep.subr.bf16.mxu0 0
        %566 = vmatpush1.bf16.msra.mxu0 0
        %567 = vmatprep.subr.bf16.mxu0 0
        %568 = vmatpush1.bf16.msra.mxu0 0
        %569 = vmatprep.mubr.bf16.mxu0 0
        %570 = vmatmul.mubr.bf16.gmra.mrb[0].mxu0 %v531
        %v571 = vpop.f32.mrb[0].mxu0
        %v572 = vadd.f32 %v487, %v571
        %v573 = vpop.f32.mrb[0].mxu0
        %v574 = vpop.f32.mrb[0].mxu0
        %v575 = vadd.f32 %v487, %v574
        %v576 = vpop.f32.mrb[0].mxu0
        %577 = vdwg.mxu0
        %vm578 = vcmp.ge.f32.partialorder %v572, 0.0
        %vm579 = vcmp.ge.f32.partialorder %v575, 0.0
        %v581 = vlaneseq
        %v582 = vshrl.u32 %v581, 7
        %v583 = vsub.s32 0, %v582
        %v584 = vrot.slane %v236, %v583
        %v586 = vmul.f32 %v584, %v572
        %v587 = vmul.f32 %v584, %v575
        %v588 = vsel %vm578, %v572, %v586
        %v589 = vsel %vm579, %v575, %v587
        %s590 = smul.u32 %s238, 16
        %s591 = scalar_lea.vmem %s233, %s590
        %vm592 = vcmask 261120
        %593 = vst.msk [vmem:[%s591] sm:$0xff] %vm592, %v588
        %vm594 = vcmask 253952
        %595 = vst.msk [vmem:[%s591 + $0x8] sm:$0x1] %vm594, %v589
      $region41: #{tpu_custom_call.1} parent=35 // loop_footer
        %s242 = sadd.s32 1, %s238
      $region42: #{tpu_custom_call.1} parent=35 // loop_footer_branch
        %237 = sbr.rel target = $region38
      $region43: #{tpu_custom_call.1} parent=35 // loop_exit
        _
      %p596 = scmp.lt.s32.totalorder %s19, 1
      %s597 = scalar_select %p596, %s19, 1
      %p598 = scmp.lt.s32.totalorder %s20, 3
      %s599 = scalar_select %p598, %s20, 3
      %s600 = smul.addr %s599, 4
      %s601 = smul.addr %s597, 16
      %s602 = sadd.s32 %s600, %s601
      %s603 = smul.addr %s602, 8
      %s604 = scalar_lea.vmem %s4, %s603
      // Predicated region
      $region44: #{tpu_custom_call.1} parent=35 // pred_check
        %p605 = pneg %p138
      $region45: #{tpu_custom_call.1} parent=35 // pred_check_branch
        %607 = sbr.rel (%p605) target = $region47
      $region46: #{tpu_custom_call.1} parent=35 // pred_region
        _
      $region47: #{tpu_custom_call.1} parent=35 // pred_fallthru
        _
    $region36: #{tpu_custom_call.1} parent=5 // pred_fallthru
      _
    %p608 = scmp.le.s32.totalorder 2, %s10
    // Predicated region
    $region48: #{tpu_custom_call.1} parent=5 // pred_check
      %p609 = pneg %p608
    $region49: #{tpu_custom_call.1} parent=5 // pred_check_branch
      %611 = sbr.rel (%p609) target = $region51
    $region50: #{tpu_custom_call.1} parent=5 // pred_region
      %s612 = ssub.s32 %s10, 2
      // Predicated region
      $region52: #{tpu_custom_call.1} parent=50 // pred_check
        %p613 = pneg %p144
      $region53: #{tpu_custom_call.1} parent=50 // pred_check_branch
        %615 = sbr.rel (%p613) target = $region55
      $region54: #{tpu_custom_call.1} parent=50 // pred_region
        %p616 = scmp.lt.s32.totalorder %s21, 1
        %s617 = scalar_select %p616, %s21, 1
        %p618 = scmp.lt.s32.totalorder %s22, 3
        %s619 = scalar_select %p618, %s22, 3
        %s620 = smul.addr %s619, 4
        %s621 = smul.addr %s617, 16
        %s622 = sadd.s32 %s620, %s621
        %s623 = smul.addr %s622, 8
        %s624 = scalar_lea.vmem %s4, %s623
      $region55: #{tpu_custom_call.1} parent=50 // pred_fallthru
        _
    $region51: #{tpu_custom_call.1} parent=5 // pred_fallthru
      _
  $region6: #{tpu_custom_call.1} parent=0 // loop_footer
    %s14 = sadd.s32 1, %s10
  $region7: #{tpu_custom_call.1} parent=0 // loop_footer_branch
    %9 = sbr.rel target = $region3
  $region8: #{tpu_custom_call.1} parent=0 // loop_exit
    _

</llo_original>
